<compile_context>
chip_gen: v7x
topology: tpu7x:2x2x1
jax: 0.10.0
libtpu: 0.0.40
codegen_flags: <defaults>
</compile_context>

<pallas_src>
import numpy as np
import jax
import jax.numpy as jnp
from jax.experimental import pallas as pl
from jax.experimental.pallas import tpu as pltpu


# ----------------------- module configuration -----------------------
NUM_UNIQ_VALUES = (7, 5)                  # two categorical features
EMBED_DIM = 32                            # D
F = len(NUM_UNIQ_VALUES)
STARTS = (0, NUM_UNIQ_VALUES[0])          # (0, 7)
NUM_EMB = sum(NUM_UNIQ_VALUES)            # 12
NUM_PROD = NUM_UNIQ_VALUES[0] * NUM_UNIQ_VALUES[1]   # 35
NUM_PROD_PAD = 64                         # review: pad to 64 -> K_DIM = 256
assert 128 % EMBED_DIM == 0
PACK = 128 // EMBED_DIM                   # 4 rows per 128-lane output row
K_DIM = PACK * NUM_PROD_PAD               # 256 (contraction dim, lane aligned)


def _round_up(a, b):
    return ((a + b - 1) // b) * b


def _cdiv(a, b):
    return -(-a // b)


# ----------------------------- kernel -------------------------------
def _cate_embed_kernel(x_ref, tab_ref, o_ref):
    # x_ref:   (tm4, PACK*F) int32 raw categorical features, row-major packed
    # tab_ref: (K_DIM, PACK*D) block-diagonal folded (emb @ W + b) table
    # o_ref:   (tm4, PACK*D) lane-dense packed output
    xr = x_ref[...]                                              # (tm4, PACK*F)
    tab = tab_ref[...]
    tm4 = xr.shape[0]
    # hoisted lane iota, reused for all PACK compares
    iota = jax.lax.broadcasted_iota(jnp.int32, (tm4, K_DIM), 1)
    hot = None
    for j in range(PACK):
        # fused index prep: clamp each feature, combine into product index,
        # add per-slot offset into the block-diagonal table (all cheap VPU ops)
        x0 = jnp.clip(xr[:, F * j:F * j + 1], 0, NUM_UNIQ_VALUES[0] - 1)
        x1 = jnp.clip(xr[:, F * j + 1:F * j + 2], 0, NUM_UNIQ_VALUES[1] - 1)
        idx_j = x0 * NUM_UNIQ_VALUES[1] + x1 + j * NUM_PROD_PAD  # (tm4, 1)
        eq = iota == idx_j
        hot = eq if hot is None else (hot | eq)
    # exact 0/1 multi-hot; dtype follows the table (bf16 path is lossless for it)
    onehot = hot.astype(tab.dtype)                               # (tm4, K_DIM)
    # gather + linear + bias, all folded into one MXU matmul.
    # precision pinned so the f32 path never bf16-rounds the table values.
    acc = jnp.dot(onehot, tab,
                  precision=jax.lax.Precision.HIGHEST,
                  preferred_element_type=jnp.float32)
    o_ref[...] = acc.astype(o_ref.dtype)


# ------------------------- parameter folding -------------------------
def fold_params(emb_table, w_pt, bias, dtype=jnp.float32):
    """Fold Embedding + Linear into a block-diagonal product table.

    emb_table: (NUM_EMB, D) f32; w_pt: (D, F*D) torch-layout (out, in); bias: (D,)
    Returns (K_DIM, PACK*D) in `dtype` (f32 for exact parity, bf16 for bandwidth).
    """
    D = EMBED_DIM
    hp = jax.lax.Precision.HIGHEST
    w_t = w_pt.T.astype(jnp.float32)                             # (F*D, D)
    t0 = jnp.dot(emb_table[:NUM_UNIQ_VALUES[0]], w_t[:D], precision=hp)   # (7, D)
    t1 = jnp.dot(emb_table[STARTS[1]:NUM_EMB], w_t[D:], precision=hp)     # (5, D)
    prod = (t0[:, None, :] + t1[None, :, :]).reshape(NUM_PROD, D) + bias[None, :]
    prod_pad = jnp.zeros((NUM_PROD_PAD, D), jnp.float32).at[:NUM_PROD].set(prod)
    bd = jnp.zeros((K_DIM, PACK * D), jnp.float32)
    for j in range(PACK):
        bd = bd.at[j * NUM_PROD_PAD:(j + 1) * NUM_PROD_PAD,
                   j * D:(j + 1) * D].set(prod_pad)
    return bd.astype(dtype)


# ----------------------------- wrapper -------------------------------
def cate_feature_embedding(x, bd_table, *, out_dtype=jnp.float32, tile_rows4=2048):
    """x: (B, N1, N2, F) int; bd_table: fold_params(...). Returns (B, N1, N2, D)."""
    B, N1, N2, Fx = x.shape
    assert Fx == F
    D = EMBED_DIM
    M = B * N1 * N2

    # packed-row bookkeeping: PACK original rows per 128-lane output row
    M4 = _cdiv(M, PACK)
    # cap the tile so the ("parallel",) grid keeps >= 2 blocks -> both v7x TCs
    half = _round_up(max(_cdiv(M4, 2), 8), 8)
    tm4 = max(8, min(_round_up(int(tile_rows4), 8), half))
    M4_pad = _round_up(M4, tm4)
    M_pad = M4_pad * PACK

    # only a reshape (free) when M == M_pad; small int pad otherwise
    x_flat = x.reshape(M, F).astype(jnp.int32)
    if M_pad != M:
        x_flat = jnp.zeros((M_pad, F), jnp.int32).at[:M].set(x_flat)
    x_packed = x_flat.reshape(M4_pad, PACK * F)

    grid = (M4_pad // tm4,)
    itemsize_tab = np.dtype(bd_table.dtype).itemsize
    itemsize_out = np.dtype(out_dtype).itemsize
    cost = pl.CostEstimate(
        flops=2 * M4_pad * K_DIM * PACK * D,
        transcendentals=0,
        bytes_accessed=(M4_pad * PACK * F * 4                 # raw indices in
                        + K_DIM * PACK * D * itemsize_tab     # folded table in
                        + M4_pad * PACK * D * itemsize_out),  # output out
    )

    out_packed = pl.pallas_call(
        _cate_embed_kernel,
        out_shape=jax.ShapeDtypeStruct((M4_pad, PACK * D), out_dtype),
        grid_spec=pltpu.PrefetchScalarGridSpec(
            num_scalar_prefetch=0,
            grid=grid,
            in_specs=[
                pl.BlockSpec((tm4, PACK * F), lambda i: (i, 0)),
                pl.BlockSpec((K_DIM, PACK * D), lambda i: (0, 0)),
            ],
            out_specs=pl.BlockSpec((tm4, PACK * D), lambda i: (i, 0)),
        ),
        compiler_params=pltpu.CompilerParams(
            dimension_semantics=("parallel",)),
        cost_estimate=cost,
    )(x_packed, bd_table)

    # (M4_pad, PACK*D) is the same row-major buffer as (M_pad, D).
    # When M_pad == M (true for aligned inputs like the demo) the slice is a
    # no-op; otherwise prefer slicing at the consumer to avoid an extra copy.
    out = out_packed.reshape(M_pad, D)[:M]
    return out.reshape(B, N1, N2, D)


# ------------------------------ main ---------------------------------
if __name__ == "__main__":
    key = jax.random.PRNGKey(0)
    k_emb, k_w, k_b, k_x0, k_x1 = jax.random.split(key, 5)

    D = EMBED_DIM
    B, N1, N2 = 2, 4, 8                    # M = 64 (small test shape)

    # deterministic parameter init (synthetic, not a checkpoint)
    emb_table = jax.random.normal(k_emb, (NUM_EMB, D), dtype=jnp.float32) * 0.1
    w_pt = jax.random.normal(k_w, (D, F * D), dtype=jnp.float32) * 0.05  # torch (out,in)
    bias = jax.random.normal(k_b, (D,), dtype=jnp.float32) * 0.01

    # deterministic integer inputs, each feature in [0, num_uniq_values[f])
    x0 = jax.random.randint(k_x0, (B, N1, N2, 1), 0, NUM_UNIQ_VALUES[0])
    x1 = jax.random.randint(k_x1, (B, N1, N2, 1), 0, NUM_UNIQ_VALUES[1])
    x = jnp.concatenate([x0, x1], axis=-1).astype(jnp.int32)     # (B, N1, N2, 2)

    # pure-JAX reference (unfused, original formulation, full f32 precision)
    starts = jnp.asarray(STARTS, dtype=jnp.int32)
    emb = emb_table[(x + starts)]                                # (B,N1,N2,F,D)
    ref = jnp.dot(emb.reshape(B, N1, N2, F * D), w_pt.T,
                  precision=jax.lax.Precision.HIGHEST) + bias

    # ---- f32 path (exact parity with the PyTorch module) ----
    bd_f32 = fold_params(emb_table, w_pt, bias, jnp.float32)     # fold once, reuse
    out = jax.block_until_ready(cate_feature_embedding(x, bd_f32))
    assert out.shape == (B, N1, N2, D)
    np.testing.assert_allclose(np.asarray(out), np.asarray(ref),
                               rtol=1e-5, atol=1e-5)

    # ---- bf16 path (review: halves the dominant HBM output traffic) ----
    bd_bf16 = fold_params(emb_table, w_pt, bias, jnp.bfloat16)
    out_bf16 = jax.block_until_ready(
        cate_feature_embedding(x, bd_bf16, out_dtype=jnp.bfloat16))
    np.testing.assert_allclose(np.asarray(out_bf16.astype(jnp.float32)),
                               np.asarray(ref), rtol=2e-2, atol=1e-2)

    print("KERNEL_OK")
</pallas_src>

<mosaic_0001>
module attributes {stable_mosaic.version = 11 : i64} {
  func.func @_cate_embed_kernel(%arg0: i32, %arg1: memref<8x8xi32, #tpu.memory_space<vmem>>, %arg2: memref<256x128xf32, #tpu.memory_space<vmem>>, %arg3: memref<8x128xf32, #tpu.memory_space<vmem>>) attributes {dimension_semantics = [#tpu.dimension_semantics<parallel>], iteration_bounds = array<i64: 2>, scalar_prefetch = 0 : i64, scratch_operands = 0 : i64, tpu.core_type = #tpu.core_type<tc>, window_params = [{transform_indices = @transform_0, window_bounds = array<i64: 8, 8>}, {pipeline_mode = #tpu.pipeline_mode<synchronous>, transform_indices = @transform_1, window_bounds = array<i64: 256, 128>}, {transform_indices = @transform_2, window_bounds = array<i64: 8, 128>}]} {
    %c0 = arith.constant 0 : index
    %c0_0 = arith.constant 0 : index
    %0 = vector.load %arg1[%c0, %c0_0] : memref<8x8xi32, #tpu.memory_space<vmem>>, vector<8x8xi32>
    %c0_1 = arith.constant 0 : index
    %c0_2 = arith.constant 0 : index
    %1 = vector.load %arg2[%c0_1, %c0_2] : memref<256x128xf32, #tpu.memory_space<vmem>>, vector<256x128xf32>
    %2 = tpu.iota {dimensions = array<i32: 1>} : vector<8x256xi32>
    %3 = vector.extract_strided_slice %0 {offsets = [0, 0], sizes = [8, 1], strides = [1, 1]} : vector<8x8xi32> to vector<8x1xi32>
    %c0_i32 = arith.constant 0 : i32
    %c6_i32 = arith.constant 6 : i32
    %4 = vector.broadcast %c0_i32 : i32 to vector<8x1xi32>
    %5 = arith.maxsi %4, %3 : vector<8x1xi32>
    %6 = vector.broadcast %c6_i32 : i32 to vector<8x1xi32>
    %7 = arith.minsi %6, %5 : vector<8x1xi32>
    %8 = vector.extract_strided_slice %0 {offsets = [0, 1], sizes = [8, 1], strides = [1, 1]} : vector<8x8xi32> to vector<8x1xi32>
    %c0_i32_3 = arith.constant 0 : i32
    %c4_i32 = arith.constant 4 : i32
    %9 = vector.broadcast %c0_i32_3 : i32 to vector<8x1xi32>
    %10 = arith.maxsi %9, %8 : vector<8x1xi32>
    %11 = vector.broadcast %c4_i32 : i32 to vector<8x1xi32>
    %12 = arith.minsi %11, %10 : vector<8x1xi32>
    %c5_i32 = arith.constant 5 : i32
    %13 = vector.broadcast %c5_i32 : i32 to vector<8x1xi32>
    %14 = arith.muli %7, %13 : vector<8x1xi32>
    %15 = arith.addi %14, %12 : vector<8x1xi32>
    %c0_i32_4 = arith.constant 0 : i32
    %16 = vector.broadcast %c0_i32_4 : i32 to vector<8x1xi32>
    %17 = arith.addi %15, %16 : vector<8x1xi32>
    %18 = vector.broadcast %17 : vector<8x1xi32> to vector<8x256xi32>
    %19 = arith.cmpi eq, %2, %18 : vector<8x256xi32>
    %20 = vector.extract_strided_slice %0 {offsets = [0, 2], sizes = [8, 1], strides = [1, 1]} : vector<8x8xi32> to vector<8x1xi32>
    %c0_i32_5 = arith.constant 0 : i32
    %c6_i32_6 = arith.constant 6 : i32
    %21 = vector.broadcast %c0_i32_5 : i32 to vector<8x1xi32>
    %22 = arith.maxsi %21, %20 : vector<8x1xi32>
    %23 = vector.broadcast %c6_i32_6 : i32 to vector<8x1xi32>
    %24 = arith.minsi %23, %22 : vector<8x1xi32>
    %25 = vector.extract_strided_slice %0 {offsets = [0, 3], sizes = [8, 1], strides = [1, 1]} : vector<8x8xi32> to vector<8x1xi32>
    %c0_i32_7 = arith.constant 0 : i32
    %c4_i32_8 = arith.constant 4 : i32
    %26 = vector.broadcast %c0_i32_7 : i32 to vector<8x1xi32>
    %27 = arith.maxsi %26, %25 : vector<8x1xi32>
    %28 = vector.broadcast %c4_i32_8 : i32 to vector<8x1xi32>
    %29 = arith.minsi %28, %27 : vector<8x1xi32>
    %c5_i32_9 = arith.constant 5 : i32
    %30 = vector.broadcast %c5_i32_9 : i32 to vector<8x1xi32>
    %31 = arith.muli %24, %30 : vector<8x1xi32>
    %32 = arith.addi %31, %29 : vector<8x1xi32>
    %c64_i32 = arith.constant 64 : i32
    %33 = vector.broadcast %c64_i32 : i32 to vector<8x1xi32>
    %34 = arith.addi %32, %33 : vector<8x1xi32>
    %35 = vector.broadcast %34 : vector<8x1xi32> to vector<8x256xi32>
    %36 = arith.cmpi eq, %2, %35 : vector<8x256xi32>
    %37 = arith.ori %19, %36 : vector<8x256xi1>
    %38 = vector.extract_strided_slice %0 {offsets = [0, 4], sizes = [8, 1], strides = [1, 1]} : vector<8x8xi32> to vector<8x1xi32>
    %c0_i32_10 = arith.constant 0 : i32
    %c6_i32_11 = arith.constant 6 : i32
    %39 = vector.broadcast %c0_i32_10 : i32 to vector<8x1xi32>
    %40 = arith.maxsi %39, %38 : vector<8x1xi32>
    %41 = vector.broadcast %c6_i32_11 : i32 to vector<8x1xi32>
    %42 = arith.minsi %41, %40 : vector<8x1xi32>
    %43 = vector.extract_strided_slice %0 {offsets = [0, 5], sizes = [8, 1], strides = [1, 1]} : vector<8x8xi32> to vector<8x1xi32>
    %c0_i32_12 = arith.constant 0 : i32
    %c4_i32_13 = arith.constant 4 : i32
    %44 = vector.broadcast %c0_i32_12 : i32 to vector<8x1xi32>
    %45 = arith.maxsi %44, %43 : vector<8x1xi32>
    %46 = vector.broadcast %c4_i32_13 : i32 to vector<8x1xi32>
    %47 = arith.minsi %46, %45 : vector<8x1xi32>
    %c5_i32_14 = arith.constant 5 : i32
    %48 = vector.broadcast %c5_i32_14 : i32 to vector<8x1xi32>
    %49 = arith.muli %42, %48 : vector<8x1xi32>
    %50 = arith.addi %49, %47 : vector<8x1xi32>
    %c128_i32 = arith.constant 128 : i32
    %51 = vector.broadcast %c128_i32 : i32 to vector<8x1xi32>
    %52 = arith.addi %50, %51 : vector<8x1xi32>
    %53 = vector.broadcast %52 : vector<8x1xi32> to vector<8x256xi32>
    %54 = arith.cmpi eq, %2, %53 : vector<8x256xi32>
    %55 = arith.ori %37, %54 : vector<8x256xi1>
    %56 = vector.extract_strided_slice %0 {offsets = [0, 6], sizes = [8, 1], strides = [1, 1]} : vector<8x8xi32> to vector<8x1xi32>
    %c0_i32_15 = arith.constant 0 : i32
    %c6_i32_16 = arith.constant 6 : i32
    %57 = vector.broadcast %c0_i32_15 : i32 to vector<8x1xi32>
    %58 = arith.maxsi %57, %56 : vector<8x1xi32>
    %59 = vector.broadcast %c6_i32_16 : i32 to vector<8x1xi32>
    %60 = arith.minsi %59, %58 : vector<8x1xi32>
    %61 = vector.extract_strided_slice %0 {offsets = [0, 7], sizes = [8, 1], strides = [1, 1]} : vector<8x8xi32> to vector<8x1xi32>
    %c0_i32_17 = arith.constant 0 : i32
    %c4_i32_18 = arith.constant 4 : i32
    %62 = vector.broadcast %c0_i32_17 : i32 to vector<8x1xi32>
    %63 = arith.maxsi %62, %61 : vector<8x1xi32>
    %64 = vector.broadcast %c4_i32_18 : i32 to vector<8x1xi32>
    %65 = arith.minsi %64, %63 : vector<8x1xi32>
    %c5_i32_19 = arith.constant 5 : i32
    %66 = vector.broadcast %c5_i32_19 : i32 to vector<8x1xi32>
    %67 = arith.muli %60, %66 : vector<8x1xi32>
    %68 = arith.addi %67, %65 : vector<8x1xi32>
    %c192_i32 = arith.constant 192 : i32
    %69 = vector.broadcast %c192_i32 : i32 to vector<8x1xi32>
    %70 = arith.addi %68, %69 : vector<8x1xi32>
    %71 = vector.broadcast %70 : vector<8x1xi32> to vector<8x256xi32>
    %72 = arith.cmpi eq, %2, %71 : vector<8x256xi32>
    %73 = arith.ori %55, %72 : vector<8x256xi1>
    %74 = arith.extui %73 : vector<8x256xi1> to vector<8x256xi32>
    %75 = arith.sitofp %74 : vector<8x256xi32> to vector<8x256xf32>
    %cst = arith.constant dense<0.000000e+00> : vector<8x128xf32>
    %76 = tpu.matmul %75, %1, %cst {dimension_numbers = #tpu.dot_dimension_numbers<[1], [0], [0], [1], [0, 0, 1, 1], [], []>, precision = #tpu.contract_precision<fp32>} : vector<8x256xf32>, vector<256x128xf32>, vector<8x128xf32> -> vector<8x128xf32>
    %c0_20 = arith.constant 0 : index
    %c0_21 = arith.constant 0 : index
    %77 = vector.load %arg3[%c0_20, %c0_21] : memref<8x128xf32, #tpu.memory_space<vmem>>, vector<8x128xf32>
    tpu.vector_store %arg3[%c0_20, %c0_21], %76 {strides = array<i32>} : memref<8x128xf32, #tpu.memory_space<vmem>>, vector<8x128xf32>,
    return
  }
  func.func @transform_0(%arg0: i32) -> (i32, i32) {
    %c0_i32 = arith.constant 0 : i32
    %c0_i32_0 = arith.constant 0 : i32
    return %arg0, %c0_i32 : i32, i32
  }
  func.func @transform_1(%arg0: i32) -> (i32, i32) {
    %c0_i32 = arith.constant 0 : i32
    %c0_i32_0 = arith.constant 0 : i32
    %c0_i32_1 = arith.constant 0 : i32
    return %c0_i32, %c0_i32_0 : i32, i32
  }
  func.func @transform_2(%arg0: i32) -> (i32, i32) {
    %c0_i32 = arith.constant 0 : i32
    %c0_i32_0 = arith.constant 0 : i32
    return %arg0, %c0_i32 : i32, i32
  }
}

</mosaic_0001>

<llo_original>
// kernel: tpu_custom_call.1
$region0: #{tpu_custom_call.1}
  #allocation0 [shape = 'u32[]', space=smem, size = 0x4, offset = 0x4, fixed_abs, tag = 'smem constant byte address 0x4 - core index']
  #allocation1 [shape = 'u32[144,128]{1,0:T(1,128)}', space=vmem, size = 0x12000, scoped, tag = 'internal scratch']
  %s0 = inlined_call_operand.vmem [shape: s32[16,8], index: 0, kind: input, shape index: {}]
  %s1 = inlined_call_operand.hbm [shape: f32[256,128], index: 1, kind: input, shape index: {}]
  %s2 = inlined_call_operand.hbm [shape: f32[16,128], index: 2, kind: output, shape index: {}]
  %s3 = sld [smem:[#allocation0]]
  $region45: #{tpu_custom_call.1} parent=0
    _
  %s5 = ssub.s32 1, %s3
  %s6 = scalar_select 0, %s5, %s3
  $region1: #{tpu_custom_call.1} parent=0
    #allocation2 [shape = 'u8[131072]{0}', space=vmem, size = 0x20000, scoped, tag = 'input window, operand 1, single buffered']
    #allocation3 [shape = 's32[2]{0}', space=sflag, size = 0x8, scoped, tag = 'scoped memory for tpu_custom_call.1']
    #allocation4 [shape = 's32[2]{0}', space=sflag, size = 0x8, scoped, tag = 'scoped memory for tpu_custom_call.1']
    #allocation5 [shape = 'u8[8192]{0}', space=vmem, size = 0x2000, scoped, tag = 'output window, operand 0']
    %7 = vsyncpa [#allocation3], 0
    %8 = vsyncpa [#allocation4], 0
    %s9 = scalar_lea.sflag [#allocation4], 1
    %10 = vsyncpa %s9, 0
    loop: start=0, step=1, limit=4
    $region2: #{tpu_custom_call.1} parent=1 // loop_pre_header
      _
    $region3: #{tpu_custom_call.1} parent=1 // loop_header
      %s12 = sphi 0, %s16
      %p13 = scmp.ge.s32.totalorder %s12, 4
      %s22 = sphi 0, %s24
      %s25 = sphi 0, %s22
      %s26 = sphi 0, %s25
      %s42 = sphi 0, %s26
      %s46 = sphi 0, %s46
      %s48 = sphi 0, %s46
      %s49 = sphi 0, %s48
      %s63 = sphi 0, %s49
      %s69 = sphi 0, %s71
      %s72 = sphi 0, %s69
      %s73 = sphi 0, %s72
      %s89 = sphi 0, %s73
    $region4: #{tpu_custom_call.1} parent=1 // loop_header_branch
      %15 = sbr.rel (%p13) target = $region8
    $region5: #{tpu_custom_call.1} parent=1 // loop_body
      %s17 = ssub.s32 %s12, 1
      %s18 = ssub.s32 %s12, 2
      %s19 = sadd.s32 %s12, 1
      %s20 = ssub.s32 %s12, %s19
      %p21 = scmp.eq.s32.totalorder %s20, 0
      %s23 = sadd.s32 %s22, 1
      %s24 = scalar_select %p21, %s22, %s23
      %p27 = pneg %p21
      %p28 = scmp.eq.s32.totalorder %s12, 1
      %p29 = por %p27, %p28
      %p30 = scmp.ne.s32.totalorder %s22, %s25
      %p31 = scmp.eq.s32.totalorder %s12, 0
      %p32 = por %p30, %p31
      %p33 = scmp.ne.s32.totalorder %s22, %s25
      %p34 = scmp.eq.s32.totalorder %s17, 1
      %p35 = por %p33, %p34
      %p36 = scmp.ne.s32.totalorder %s25, %s26
      %p37 = scmp.eq.s32.totalorder %s17, 0
      %p38 = por %p36, %p37
      %p39 = scmp.ne.s32.totalorder %s25, %s26
      %p40 = scmp.eq.s32.totalorder %s18, 1
      %p41 = por %p39, %p40
      %p43 = scmp.ne.s32.totalorder %s26, %s42
      %p44 = scmp.eq.s32.totalorder %s18, 0
      %p45 = por %p43, %p44
      %s47 = sadd.s32 %s46, 1
      %p50 = scmp.eq.s32.totalorder %s12, 1
      %p51 = scmp.ne.s32.totalorder %s46, %s48
      %p52 = scmp.eq.s32.totalorder %s12, 0
      %p53 = por %p51, %p52
      %p54 = scmp.ne.s32.totalorder %s46, %s48
      %p55 = scmp.eq.s32.totalorder %s17, 1
      %p56 = por %p54, %p55
      %p57 = scmp.ne.s32.totalorder %s48, %s49
      %p58 = scmp.eq.s32.totalorder %s17, 0
      %p59 = por %p57, %p58
      %p60 = scmp.ne.s32.totalorder %s48, %s49
      %p61 = scmp.eq.s32.totalorder %s18, 1
      %p62 = por %p60, %p61
      %p64 = scmp.ne.s32.totalorder %s49, %s63
      %p65 = scmp.eq.s32.totalorder %s18, 0
      %p66 = por %p64, %p65
      %s67 = ssub.s32 %s12, %s19
      %p68 = scmp.eq.s32.totalorder %s67, 0
      %s70 = sadd.s32 %s69, 1
      %s71 = scalar_select %p68, %s69, %s70
      %p74 = pneg %p68
      %p75 = scmp.eq.s32.totalorder %s12, 1
      %p76 = por %p74, %p75
      %p77 = scmp.ne.s32.totalorder %s69, %s72
      %p78 = scmp.eq.s32.totalorder %s12, 0
      %p79 = por %p77, %p78
      %p80 = scmp.ne.s32.totalorder %s69, %s72
      %p81 = scmp.eq.s32.totalorder %s17, 1
      %p82 = por %p80, %p81
      %p83 = scmp.ne.s32.totalorder %s72, %s73
      %p84 = scmp.eq.s32.totalorder %s17, 0
      %p85 = por %p83, %p84
      %p86 = scmp.ne.s32.totalorder %s72, %s73
      %p87 = scmp.eq.s32.totalorder %s18, 1
      %p88 = por %p86, %p87
      %p90 = scmp.ne.s32.totalorder %s73, %s89
      %p91 = scmp.eq.s32.totalorder %s18, 0
      %p92 = por %p90, %p91
      %p93 = scmp.le.s32.totalorder 1, %s12
      %p94 = scmp.lt.s32.totalorder %s12, 3
      %p95 = pnand %p93, %p94
      %p96 = pneg %p95
      // Predicated region
      $region9: #{tpu_custom_call.1} parent=5 // pred_check
        _
      $region10: #{tpu_custom_call.1} parent=5 // pred_check_branch
        %98 = sbr.rel (%p95) target = $region12
      $region11: #{tpu_custom_call.1} parent=5 // pred_region
        %s99 = ssub.s32 %s12, 1
        // Predicated region
        $region13: #{tpu_custom_call.1} parent=11 // pred_check
          %p100 = pneg %p59
        $region14: #{tpu_custom_call.1} parent=11 // pred_check_branch
          %102 = sbr.rel (%p100) target = $region16
        $region15: #{tpu_custom_call.1} parent=11 // pred_region
          %s104 = ssub.s32 4096, 4096
          %105 = vsyncadd [#allocation3], %s104
          %s106 = sshll.u32 [#allocation2], 4
          %s107 = int_to_ptr.vmem [resolvable:$true] %s106
          %112 = dma.hbm_to_vmem [thread:$0]  %s1, 4096, %s107, [#allocation3], 128, 128, 8
        $region16: #{tpu_custom_call.1} parent=11 // pred_fallthru
          _
      $region12: #{tpu_custom_call.1} parent=5 // pred_fallthru
        _
      %p113 = scmp.lt.s32.totalorder %s12, 2
      // Predicated region
      $region17: #{tpu_custom_call.1} parent=5 // pred_check
        %p114 = pneg %p113
      $region18: #{tpu_custom_call.1} parent=5 // pred_check_branch
        %116 = sbr.rel (%p114) target = $region20
      $region19: #{tpu_custom_call.1} parent=5 // pred_region
        // Predicated region
        $region21: #{tpu_custom_call.1} parent=19 // pred_check
          %p117 = pneg %p32
        $region22: #{tpu_custom_call.1} parent=19 // pred_check_branch
          %119 = sbr.rel (%p117) target = $region24
        $region23: #{tpu_custom_call.1} parent=19 // pred_region
          %p120 = scmp.lt.s32.totalorder %s12, 1
          %s121 = scalar_select %p120, %s12, 1
          %s122 = smul.addr %s121, 8
          %s123 = scalar_lea.vmem %s0, %s122
        $region24: #{tpu_custom_call.1} parent=19 // pred_fallthru
          _
      $region20: #{tpu_custom_call.1} parent=5 // pred_fallthru
        _
      %p124 = scmp.le.s32.totalorder 1, %s12
      %p125 = scmp.lt.s32.totalorder %s12, 3
      %p126 = pnand %p124, %p125
      %p127 = pneg %p126
      // Predicated region
      $region25: #{tpu_custom_call.1} parent=5 // pred_check
        _
      $region26: #{tpu_custom_call.1} parent=5 // pred_check_branch
        %129 = sbr.rel (%p126) target = $region28
      $region27: #{tpu_custom_call.1} parent=5 // pred_region
        %s130 = ssub.s32 %s12, 1
        // Predicated region
        $region29: #{tpu_custom_call.1} parent=27 // pred_check
          %p131 = pneg %p59
        $region30: #{tpu_custom_call.1} parent=27 // pred_check_branch
          %133 = sbr.rel (%p131) target = $region32
        $region31: #{tpu_custom_call.1} parent=27 // pred_region
          %134 = dma.done [#allocation3], 4096
        $region32: #{tpu_custom_call.1} parent=27 // pred_fallthru
          _
        %p135 = scmp.lt.s32.totalorder %s17, 1
        %s136 = scalar_select %p135, %s17, 1
        %s137 = smul.addr %s136, 8
        %s138 = scalar_lea.vmem %s0, %s137
        %p139 = pneg %p38
        %p140 = pneg %p35
        %p141 = pneg %p59
        %p142 = pneg %p56
        %p143 = pneg %p85
        %p144 = pneg %p82
        %s145 = sand.u32 %s72, 1
        %s146 = scalar_lea.sflag [#allocation4], %s145
        %s147 = sand.u32 %s72, 1
        %s148 = smul.addr %s147, 8
        %s149 = scalar_lea.vmem [#allocation5], %s148
        %p150 = scmp.lt.s32.totalorder %s17, 1
        %s151 = scalar_select %p150, %s17, 1
        %s152 = smul.addr %s151, 8
        %s153 = scalar_lea.vmem %s0, %s152
        %v154 = vld [vmem:[%s153] sm:$0xff]
        %v155 = vld [vmem:[#allocation2] sm:$0xff]
        %v156 = vld [vmem:[#allocation2 + $0x8] sm:$0xff]
        %v157 = vld [vmem:[#allocation2 + $0x10] sm:$0xff]
        %v158 = vld [vmem:[#allocation2 + $0x18] sm:$0xff]
        %v159 = vld [vmem:[#allocation2 + $0x20] sm:$0xff]
        %v160 = vld [vmem:[#allocation2 + $0x28] sm:$0xff]
        %v161 = vld [vmem:[#allocation2 + $0x30] sm:$0xff]
        %v162 = vld [vmem:[#allocation2 + $0x38] sm:$0xff]
        %v163 = vld [vmem:[#allocation2 + $0x40] sm:$0xff]
        %v164 = vld [vmem:[#allocation2 + $0x48] sm:$0xff]
        %v165 = vld [vmem:[#allocation2 + $0x50] sm:$0xff]
        %v166 = vld [vmem:[#allocation2 + $0x58] sm:$0xff]
        %v167 = vld [vmem:[#allocation2 + $0x60] sm:$0xff]
        %v168 = vld [vmem:[#allocation2 + $0x68] sm:$0xff]
        %v169 = vld [vmem:[#allocation2 + $0x70] sm:$0xff]
        %v170 = vld [vmem:[#allocation2 + $0x78] sm:$0xff]
        %v171 = vld [vmem:[#allocation2 + $0x80] sm:$0xff]
        %v172 = vld [vmem:[#allocation2 + $0x88] sm:$0xff]
        %v173 = vld [vmem:[#allocation2 + $0x90] sm:$0xff]
        %v174 = vld [vmem:[#allocation2 + $0x98] sm:$0xff]
        %v175 = vld [vmem:[#allocation2 + $0xa0] sm:$0xff]
        %v176 = vld [vmem:[#allocation2 + $0xa8] sm:$0xff]
        %v177 = vld [vmem:[#allocation2 + $0xb0] sm:$0xff]
        %v178 = vld [vmem:[#allocation2 + $0xb8] sm:$0xff]
        %v179 = vld [vmem:[#allocation2 + $0xc0] sm:$0xff]
        %v180 = vld [vmem:[#allocation2 + $0xc8] sm:$0xff]
        %v181 = vld [vmem:[#allocation2 + $0xd0] sm:$0xff]
        %v182 = vld [vmem:[#allocation2 + $0xd8] sm:$0xff]
        %v183 = vld [vmem:[#allocation2 + $0xe0] sm:$0xff]
        %v184 = vld [vmem:[#allocation2 + $0xe8] sm:$0xff]
        %v185 = vld [vmem:[#allocation2 + $0xf0] sm:$0xff]
        %v186 = vld [vmem:[#allocation2 + $0xf8] sm:$0xff]
        %v187 = vlaneseq
        %v188 = vand.u32 %v187, 127
        %v189 = vadd.s32 %v188, 128
        %vm190 = vcmp.gt.s32.totalorder %v154, 0
        %v191 = vsel %vm190, %v154, 0
        %vm192 = vcmp.lt.s32.totalorder %v191, 6
        %v193 = vsel %vm192, %v191, 6
        %vm194 = vcmp.lt.s32.totalorder %v191, 4
        %v195 = vsel %vm194, %v191, 4
        %v196 = vmul.u32 %v193, 5
        %197 = vrot.lane.b32.xlu0 %v195, 127
        %v198 = vpop.permute.xlu0 %197
        %v199 = vadd.s32 %v196, %v198
        %200 = vset.pattern.permute.xlu0 0
        %201 = vperm.xlu0 %200, %v199
        %v202 = vpop.permute.xlu0 %201
        %vm203 = vcmp.eq.s32.totalorder %v188, %v202
        %vm204 = vcmp.eq.s32.totalorder %v189, %v202
        %v205 = vadd.s32 %v199, 64
        %206 = vset.pattern.permute.xlu0 2
        %207 = vperm.xlu0 %206, %v205
        %v208 = vpop.permute.xlu0 %207
        %vm209 = vcmp.eq.s32.totalorder %v188, %v208
        %vm210 = vcmp.eq.s32.totalorder %v189, %v208
        %vm211 = vmor %vm203, %vm209
        %vm212 = vmor %vm204, %vm210
        %v213 = vadd.s32 %v199, 128
        %214 = vset.pattern.permute.xlu0 4
        %215 = vperm.xlu0 %214, %v213
        %v216 = vpop.permute.xlu0 %215
        %vm217 = vcmp.eq.s32.totalorder %v188, %v216
        %vm218 = vcmp.eq.s32.totalorder %v189, %v216
        %vm219 = vmor %vm211, %vm217
        %vm220 = vmor %vm212, %vm218
        %v221 = vadd.s32 %v199, 192
        %222 = vset.pattern.permute.xlu0 6
        %223 = vperm.xlu0 %222, %v221
        %v224 = vpop.permute.xlu0 %223
        %vm225 = vcmp.eq.s32.totalorder %v188, %v224
        %vm226 = vcmp.eq.s32.totalorder %v189, %v224
        %vm227 = vmor %vm219, %vm225
        %vm228 = vmor %vm220, %vm226
        %v229 = vsel %vm227, 1, 0
        %v230 = vsel %vm228, 1, 0
        %v231 = vcvt.s32.f32 %v229
        %v232 = vcvt.s32.f32 %v230
        %233 = vmatprep.subr.mxu0 0.0
        %v234 = vand.u32 %v155, 4294901760
        %235 = vmatpush1.msra.mxu0 %v234
        %236 = vmatprep.subr.mxu0 0.0
        %v237 = vand.u32 %v156, 4294901760
        %238 = vmatpush1.msra.mxu0 %v237
        %239 = vmatprep.subr.mxu0 0.0
        %v240 = vand.u32 %v157, 4294901760
        %241 = vmatpush1.msra.mxu0 %v240
        %242 = vmatprep.subr.mxu0 0.0
        %v243 = vand.u32 %v158, 4294901760
        %244 = vmatpush1.msra.mxu0 %v243
        %245 = vmatprep.subr.mxu0 0.0
        %v246 = vand.u32 %v159, 4294901760
        %247 = vmatpush1.msra.mxu0 %v246
        %248 = vmatprep.subr.mxu0 0.0
        %v249 = vand.u32 %v160, 4294901760
        %250 = vmatpush1.msra.mxu0 %v249
        %251 = vmatprep.subr.mxu0 0.0
        %v252 = vand.u32 %v161, 4294901760
        %253 = vmatpush1.msra.mxu0 %v252
        %254 = vmatprep.subr.mxu0 0.0
        %v255 = vand.u32 %v162, 4294901760
        %256 = vmatpush1.msra.mxu0 %v255
        %257 = vmatprep.subr.mxu0 0.0
        %v258 = vand.u32 %v163, 4294901760
        %259 = vmatpush1.msra.mxu0 %v258
        %260 = vmatprep.subr.mxu0 0.0
        %v261 = vand.u32 %v164, 4294901760
        %262 = vmatpush1.msra.mxu0 %v261
        %263 = vmatprep.subr.mxu0 0.0
        %v264 = vand.u32 %v165, 4294901760
        %265 = vmatpush1.msra.mxu0 %v264
        %266 = vmatprep.subr.mxu0 0.0
        %v267 = vand.u32 %v166, 4294901760
        %268 = vmatpush1.msra.mxu0 %v267
        %269 = vmatprep.subr.mxu0 0.0
        %v270 = vand.u32 %v167, 4294901760
        %271 = vmatpush1.msra.mxu0 %v270
        %272 = vmatprep.subr.mxu0 0.0
        %v273 = vand.u32 %v168, 4294901760
        %274 = vmatpush1.msra.mxu0 %v273
        %275 = vmatprep.subr.mxu0 0.0
        %v276 = vand.u32 %v169, 4294901760
        %277 = vmatpush1.msra.mxu0 %v276
        %278 = vmatprep.subr.mxu0 0.0
        %v279 = vand.u32 %v170, 4294901760
        %280 = vmatpush1.msra.mxu0 %v279
        %281 = vmatprep.subr.mxu0 0.0
        %v282 = vand.u32 %v171, 4294901760
        %283 = vmatpush1.msra.mxu0 %v282
        %284 = vmatprep.subr.mxu0 0.0
        %v285 = vand.u32 %v172, 4294901760
        %286 = vmatpush1.msra.mxu0 %v285
        %287 = vmatprep.subr.mxu0 0.0
        %v288 = vand.u32 %v173, 4294901760
        %289 = vmatpush1.msra.mxu0 %v288
        %290 = vmatprep.subr.mxu0 0.0
        %v291 = vand.u32 %v174, 4294901760
        %292 = vmatpush1.msra.mxu0 %v291
        %293 = vmatprep.subr.mxu0 0.0
        %v294 = vand.u32 %v175, 4294901760
        %295 = vmatpush1.msra.mxu0 %v294
        %296 = vmatprep.subr.mxu0 0.0
        %v297 = vand.u32 %v176, 4294901760
        %298 = vmatpush1.msra.mxu0 %v297
        %299 = vmatprep.subr.mxu0 0.0
        %v300 = vand.u32 %v177, 4294901760
        %301 = vmatpush1.msra.mxu0 %v300
        %302 = vmatprep.subr.mxu0 0.0
        %v303 = vand.u32 %v178, 4294901760
        %304 = vmatpush1.msra.mxu0 %v303
        %305 = vmatprep.subr.mxu0 0.0
        %v306 = vand.u32 %v179, 4294901760
        %307 = vmatpush1.msra.mxu0 %v306
        %308 = vmatprep.subr.mxu0 0.0
        %v309 = vand.u32 %v180, 4294901760
        %310 = vmatpush1.msra.mxu0 %v309
        %311 = vmatprep.subr.mxu0 0.0
        %v312 = vand.u32 %v181, 4294901760
        %313 = vmatpush1.msra.mxu0 %v312
        %314 = vmatprep.subr.mxu0 0.0
        %v315 = vand.u32 %v182, 4294901760
        %316 = vmatpush1.msra.mxu0 %v315
        %317 = vmatprep.subr.mxu0 0.0
        %v318 = vand.u32 %v183, 4294901760
        %319 = vmatpush1.msra.mxu0 %v318
        %320 = vmatprep.subr.mxu0 0.0
        %v321 = vand.u32 %v184, 4294901760
        %322 = vmatpush1.msra.mxu0 %v321
        %323 = vmatprep.subr.mxu0 0.0
        %v324 = vand.u32 %v185, 4294901760
        %325 = vmatpush1.msra.mxu0 %v324
        %326 = vmatprep.subr.mxu0 0.0
        %v327 = vand.u32 %v186, 4294901760
        %328 = vmatpush1.msra.mxu0 %v327
        %v329 = vand.u32 %v232, 4294901760
        %v330 = vsub.f32 %v232, %v329
        %v331 = vand.u32 %v330, 4294901760
        %v332 = vsub.f32 %v330, %v331
        %v333 = vand.u32 %v332, 4294901760
        %334 = vmatprep.mubr.f32.mxu0 %v333
        %v335 = vand.u32 %v231, 4294901760
        %v336 = vsub.f32 %v231, %v335
        %v337 = vand.u32 %v336, 4294901760
        %v338 = vsub.f32 %v336, %v337
        %v339 = vand.u32 %v338, 4294901760
        %340 = vmatmul.mubr.f32.gmra.mrb[0].mxu0 %v339
        %v341 = vpop.f32.mrb[0].mxu0
        %v342 = vadd.f32 0.0, %v341
        %v343 = vpop.f32.mrb[0].mxu0
        %344 = vdwg.mxu0
        %345 = vmatprep.subr.mxu0 0.0
        %v346 = vand.u32 %v155, 4294901760
        %v347 = vsub.f32 %v155, %v346
        %v348 = vand.u32 %v347, 4294901760
        %v349 = vsub.f32 %v347, %v348
        %v350 = vand.u32 %v349, 4294901760
        %351 = vmatpush1.msra.mxu0 %v350
        %352 = vmatprep.subr.mxu0 0.0
        %v353 = vand.u32 %v156, 4294901760
        %v354 = vsub.f32 %v156, %v353
        %v355 = vand.u32 %v354, 4294901760
        %v356 = vsub.f32 %v354, %v355
        %v357 = vand.u32 %v356, 4294901760
        %358 = vmatpush1.msra.mxu0 %v357
        %359 = vmatprep.subr.mxu0 0.0
        %v360 = vand.u32 %v157, 4294901760
        %v361 = vsub.f32 %v157, %v360
        %v362 = vand.u32 %v361, 4294901760
        %v363 = vsub.f32 %v361, %v362
        %v364 = vand.u32 %v363, 4294901760
        %365 = vmatpush1.msra.mxu0 %v364
        %366 = vmatprep.subr.mxu0 0.0
        %v367 = vand.u32 %v158, 4294901760
        %v368 = vsub.f32 %v158, %v367
        %v369 = vand.u32 %v368, 4294901760
        %v370 = vsub.f32 %v368, %v369
        %v371 = vand.u32 %v370, 4294901760
        %372 = vmatpush1.msra.mxu0 %v371
        %373 = vmatprep.subr.mxu0 0.0
        %v374 = vand.u32 %v159, 4294901760
        %v375 = vsub.f32 %v159, %v374
        %v376 = vand.u32 %v375, 4294901760
        %v377 = vsub.f32 %v375, %v376
        %v378 = vand.u32 %v377, 4294901760
        %379 = vmatpush1.msra.mxu0 %v378
        %380 = vmatprep.subr.mxu0 0.0
        %v381 = vand.u32 %v160, 4294901760
        %v382 = vsub.f32 %v160, %v381
        %v383 = vand.u32 %v382, 4294901760
        %v384 = vsub.f32 %v382, %v383
        %v385 = vand.u32 %v384, 4294901760
        %386 = vmatpush1.msra.mxu0 %v385
        %387 = vmatprep.subr.mxu0 0.0
        %v388 = vand.u32 %v161, 4294901760
        %v389 = vsub.f32 %v161, %v388
        %v390 = vand.u32 %v389, 4294901760
        %v391 = vsub.f32 %v389, %v390
        %v392 = vand.u32 %v391, 4294901760
        %393 = vmatpush1.msra.mxu0 %v392
        %394 = vmatprep.subr.mxu0 0.0
        %v395 = vand.u32 %v162, 4294901760
        %v396 = vsub.f32 %v162, %v395
        %v397 = vand.u32 %v396, 4294901760
        %v398 = vsub.f32 %v396, %v397
        %v399 = vand.u32 %v398, 4294901760
        %400 = vmatpush1.msra.mxu0 %v399
        %401 = vmatprep.subr.mxu0 0.0
        %v402 = vand.u32 %v163, 4294901760
        %v403 = vsub.f32 %v163, %v402
        %v404 = vand.u32 %v403, 4294901760
        %v405 = vsub.f32 %v403, %v404
        %v406 = vand.u32 %v405, 4294901760
        %407 = vmatpush1.msra.mxu0 %v406
        %408 = vmatprep.subr.mxu0 0.0
        %v409 = vand.u32 %v164, 4294901760
        %v410 = vsub.f32 %v164, %v409
        %v411 = vand.u32 %v410, 4294901760
        %v412 = vsub.f32 %v410, %v411
        %v413 = vand.u32 %v412, 4294901760
        %414 = vmatpush1.msra.mxu0 %v413
        %415 = vmatprep.subr.mxu0 0.0
        %v416 = vand.u32 %v165, 4294901760
        %v417 = vsub.f32 %v165, %v416
        %v418 = vand.u32 %v417, 4294901760
        %v419 = vsub.f32 %v417, %v418
        %v420 = vand.u32 %v419, 4294901760
        %421 = vmatpush1.msra.mxu0 %v420
        %422 = vmatprep.subr.mxu0 0.0
        %v423 = vand.u32 %v166, 4294901760
        %v424 = vsub.f32 %v166, %v423
        %v425 = vand.u32 %v424, 4294901760
        %v426 = vsub.f32 %v424, %v425
        %v427 = vand.u32 %v426, 4294901760
        %428 = vmatpush1.msra.mxu0 %v427
        %429 = vmatprep.subr.mxu0 0.0
        %v430 = vand.u32 %v167, 4294901760
        %v431 = vsub.f32 %v167, %v430
        %v432 = vand.u32 %v431, 4294901760
        %v433 = vsub.f32 %v431, %v432
        %v434 = vand.u32 %v433, 4294901760
        %435 = vmatpush1.msra.mxu0 %v434
        %436 = vmatprep.subr.mxu0 0.0
        %v437 = vand.u32 %v168, 4294901760
        %v438 = vsub.f32 %v168, %v437
        %v439 = vand.u32 %v438, 4294901760
        %v440 = vsub.f32 %v438, %v439
        %v441 = vand.u32 %v440, 4294901760
        %442 = vmatpush1.msra.mxu0 %v441
        %443 = vmatprep.subr.mxu0 0.0
        %v444 = vand.u32 %v169, 4294901760
        %v445 = vsub.f32 %v169, %v444
        %v446 = vand.u32 %v445, 4294901760
        %v447 = vsub.f32 %v445, %v446
        %v448 = vand.u32 %v447, 4294901760
        %449 = vmatpush1.msra.mxu0 %v448
        %450 = vmatprep.subr.mxu0 0.0
        %v451 = vand.u32 %v170, 4294901760
        %v452 = vsub.f32 %v170, %v451
        %v453 = vand.u32 %v452, 4294901760
        %v454 = vsub.f32 %v452, %v453
        %v455 = vand.u32 %v454, 4294901760
        %456 = vmatpush1.msra.mxu0 %v455
        %457 = vmatprep.subr.mxu0 0.0
        %v458 = vand.u32 %v171, 4294901760
        %v459 = vsub.f32 %v171, %v458
        %v460 = vand.u32 %v459, 4294901760
        %v461 = vsub.f32 %v459, %v460
        %v462 = vand.u32 %v461, 4294901760
        %463 = vmatpush1.msra.mxu0 %v462
        %464 = vmatprep.subr.mxu0 0.0
        %v465 = vand.u32 %v172, 4294901760
        %v466 = vsub.f32 %v172, %v465
        %v467 = vand.u32 %v466, 4294901760
        %v468 = vsub.f32 %v466, %v467
        %v469 = vand.u32 %v468, 4294901760
        %470 = vmatpush1.msra.mxu0 %v469
        %471 = vmatprep.subr.mxu0 0.0
        %v472 = vand.u32 %v173, 4294901760
        %v473 = vsub.f32 %v173, %v472
        %v474 = vand.u32 %v473, 4294901760
        %v475 = vsub.f32 %v473, %v474
        %v476 = vand.u32 %v475, 4294901760
        %477 = vmatpush1.msra.mxu0 %v476
        %478 = vmatprep.subr.mxu0 0.0
        %v479 = vand.u32 %v174, 4294901760
        %v480 = vsub.f32 %v174, %v479
        %v481 = vand.u32 %v480, 4294901760
        %v482 = vsub.f32 %v480, %v481
        %v483 = vand.u32 %v482, 4294901760
        %484 = vmatpush1.msra.mxu0 %v483
        %485 = vmatprep.subr.mxu0 0.0
        %v486 = vand.u32 %v175, 4294901760
        %v487 = vsub.f32 %v175, %v486
        %v488 = vand.u32 %v487, 4294901760
        %v489 = vsub.f32 %v487, %v488
        %v490 = vand.u32 %v489, 4294901760
        %491 = vmatpush1.msra.mxu0 %v490
        %492 = vmatprep.subr.mxu0 0.0
        %v493 = vand.u32 %v176, 4294901760
        %v494 = vsub.f32 %v176, %v493
        %v495 = vand.u32 %v494, 4294901760
        %v496 = vsub.f32 %v494, %v495
        %v497 = vand.u32 %v496, 4294901760
        %498 = vmatpush1.msra.mxu0 %v497
        %499 = vmatprep.subr.mxu0 0.0
        %v500 = vand.u32 %v177, 4294901760
        %v501 = vsub.f32 %v177, %v500
        %v502 = vand.u32 %v501, 4294901760
        %v503 = vsub.f32 %v501, %v502
        %v504 = vand.u32 %v503, 4294901760
        %505 = vmatpush1.msra.mxu0 %v504
        %506 = vmatprep.subr.mxu0 0.0
        %v507 = vand.u32 %v178, 4294901760
        %v508 = vsub.f32 %v178, %v507
        %v509 = vand.u32 %v508, 4294901760
        %v510 = vsub.f32 %v508, %v509
        %v511 = vand.u32 %v510, 4294901760
        %512 = vmatpush1.msra.mxu0 %v511
        %513 = vmatprep.subr.mxu0 0.0
        %v514 = vand.u32 %v179, 4294901760
        %v515 = vsub.f32 %v179, %v514
        %v516 = vand.u32 %v515, 4294901760
        %v517 = vsub.f32 %v515, %v516
        %v518 = vand.u32 %v517, 4294901760
        %519 = vmatpush1.msra.mxu0 %v518
        %520 = vmatprep.subr.mxu0 0.0
        %v521 = vand.u32 %v180, 4294901760
        %v522 = vsub.f32 %v180, %v521
        %v523 = vand.u32 %v522, 4294901760
        %v524 = vsub.f32 %v522, %v523
        %v525 = vand.u32 %v524, 4294901760
        %526 = vmatpush1.msra.mxu0 %v525
        %527 = vmatprep.subr.mxu0 0.0
        %v528 = vand.u32 %v181, 4294901760
        %v529 = vsub.f32 %v181, %v528
        %v530 = vand.u32 %v529, 4294901760
        %v531 = vsub.f32 %v529, %v530
        %v532 = vand.u32 %v531, 4294901760
        %533 = vmatpush1.msra.mxu0 %v532
        %534 = vmatprep.subr.mxu0 0.0
        %v535 = vand.u32 %v182, 4294901760
        %v536 = vsub.f32 %v182, %v535
        %v537 = vand.u32 %v536, 4294901760
        %v538 = vsub.f32 %v536, %v537
        %v539 = vand.u32 %v538, 4294901760
        %540 = vmatpush1.msra.mxu0 %v539
        %541 = vmatprep.subr.mxu0 0.0
        %v542 = vand.u32 %v183, 4294901760
        %v543 = vsub.f32 %v183, %v542
        %v544 = vand.u32 %v543, 4294901760
        %v545 = vsub.f32 %v543, %v544
        %v546 = vand.u32 %v545, 4294901760
        %547 = vmatpush1.msra.mxu0 %v546
        %548 = vmatprep.subr.mxu0 0.0
        %v549 = vand.u32 %v184, 4294901760
        %v550 = vsub.f32 %v184, %v549
        %v551 = vand.u32 %v550, 4294901760
        %v552 = vsub.f32 %v550, %v551
        %v553 = vand.u32 %v552, 4294901760
        %554 = vmatpush1.msra.mxu0 %v553
        %555 = vmatprep.subr.mxu0 0.0
        %v556 = vand.u32 %v185, 4294901760
        %v557 = vsub.f32 %v185, %v556
        %v558 = vand.u32 %v557, 4294901760
        %v559 = vsub.f32 %v557, %v558
        %v560 = vand.u32 %v559, 4294901760
        %561 = vmatpush1.msra.mxu0 %v560
        %562 = vmatprep.subr.mxu0 0.0
        %v563 = vand.u32 %v186, 4294901760
        %v564 = vsub.f32 %v186, %v563
        %v565 = vand.u32 %v564, 4294901760
        %v566 = vsub.f32 %v564, %v565
        %v567 = vand.u32 %v566, 4294901760
        %568 = vmatpush1.msra.mxu0 %v567
        %v569 = vand.u32 %v232, 4294901760
        %570 = vmatprep.mubr.f32.mxu0 %v569
        %v571 = vand.u32 %v231, 4294901760
        %572 = vmatmul.mubr.f32.gmra.mrb[0].mxu0 %v571
        %v573 = vpop.f32.mrb[0].mxu0
        %v574 = vadd.f32 %v342, %v573
        %v575 = vpop.f32.mrb[0].mxu0
        %576 = vdwg.mxu0
        %577 = vmatprep.subr.mxu0 0.0
        %v578 = vand.u32 %v155, 4294901760
        %v579 = vsub.f32 %v155, %v578
        %580 = vmatpush1.msra.mxu0 %v579
        %581 = vmatprep.subr.mxu0 0.0
        %v582 = vand.u32 %v156, 4294901760
        %v583 = vsub.f32 %v156, %v582
        %584 = vmatpush1.msra.mxu0 %v583
        %585 = vmatprep.subr.mxu0 0.0
        %v586 = vand.u32 %v157, 4294901760
        %v587 = vsub.f32 %v157, %v586
        %588 = vmatpush1.msra.mxu0 %v587
        %589 = vmatprep.subr.mxu0 0.0
        %v590 = vand.u32 %v158, 4294901760
        %v591 = vsub.f32 %v158, %v590
        %592 = vmatpush1.msra.mxu0 %v591
        %593 = vmatprep.subr.mxu0 0.0
        %v594 = vand.u32 %v159, 4294901760
        %v595 = vsub.f32 %v159, %v594
        %596 = vmatpush1.msra.mxu0 %v595
        %597 = vmatprep.subr.mxu0 0.0
        %v598 = vand.u32 %v160, 4294901760
        %v599 = vsub.f32 %v160, %v598
        %600 = vmatpush1.msra.mxu0 %v599
        %601 = vmatprep.subr.mxu0 0.0
        %v602 = vand.u32 %v161, 4294901760
        %v603 = vsub.f32 %v161, %v602
        %604 = vmatpush1.msra.mxu0 %v603
        %605 = vmatprep.subr.mxu0 0.0
        %v606 = vand.u32 %v162, 4294901760
        %v607 = vsub.f32 %v162, %v606
        %608 = vmatpush1.msra.mxu0 %v607
        %609 = vmatprep.subr.mxu0 0.0
        %v610 = vand.u32 %v163, 4294901760
        %v611 = vsub.f32 %v163, %v610
        %612 = vmatpush1.msra.mxu0 %v611
        %613 = vmatprep.subr.mxu0 0.0
        %v614 = vand.u32 %v164, 4294901760
        %v615 = vsub.f32 %v164, %v614
        %616 = vmatpush1.msra.mxu0 %v615
        %617 = vmatprep.subr.mxu0 0.0
        %v618 = vand.u32 %v165, 4294901760
        %v619 = vsub.f32 %v165, %v618
        %620 = vmatpush1.msra.mxu0 %v619
        %621 = vmatprep.subr.mxu0 0.0
        %v622 = vand.u32 %v166, 4294901760
        %v623 = vsub.f32 %v166, %v622
        %624 = vmatpush1.msra.mxu0 %v623
        %625 = vmatprep.subr.mxu0 0.0
        %v626 = vand.u32 %v167, 4294901760
        %v627 = vsub.f32 %v167, %v626
        %628 = vmatpush1.msra.mxu0 %v627
        %629 = vmatprep.subr.mxu0 0.0
        %v630 = vand.u32 %v168, 4294901760
        %v631 = vsub.f32 %v168, %v630
        %632 = vmatpush1.msra.mxu0 %v631
        %633 = vmatprep.subr.mxu0 0.0
        %v634 = vand.u32 %v169, 4294901760
        %v635 = vsub.f32 %v169, %v634
        %636 = vmatpush1.msra.mxu0 %v635
        %637 = vmatprep.subr.mxu0 0.0
        %v638 = vand.u32 %v170, 4294901760
        %v639 = vsub.f32 %v170, %v638
        %640 = vmatpush1.msra.mxu0 %v639
        %641 = vmatprep.subr.mxu0 0.0
        %v642 = vand.u32 %v171, 4294901760
        %v643 = vsub.f32 %v171, %v642
        %644 = vmatpush1.msra.mxu0 %v643
        %645 = vmatprep.subr.mxu0 0.0
        %v646 = vand.u32 %v172, 4294901760
        %v647 = vsub.f32 %v172, %v646
        %648 = vmatpush1.msra.mxu0 %v647
        %649 = vmatprep.subr.mxu0 0.0
        %v650 = vand.u32 %v173, 4294901760
        %v651 = vsub.f32 %v173, %v650
        %652 = vmatpush1.msra.mxu0 %v651
        %653 = vmatprep.subr.mxu0 0.0
        %v654 = vand.u32 %v174, 4294901760
        %v655 = vsub.f32 %v174, %v654
        %656 = vmatpush1.msra.mxu0 %v655
        %657 = vmatprep.subr.mxu0 0.0
        %v658 = vand.u32 %v175, 4294901760
        %v659 = vsub.f32 %v175, %v658
        %660 = vmatpush1.msra.mxu0 %v659
        %661 = vmatprep.subr.mxu0 0.0
        %v662 = vand.u32 %v176, 4294901760
        %v663 = vsub.f32 %v176, %v662
        %664 = vmatpush1.msra.mxu0 %v663
        %665 = vmatprep.subr.mxu0 0.0
        %v666 = vand.u32 %v177, 4294901760
        %v667 = vsub.f32 %v177, %v666
        %668 = vmatpush1.msra.mxu0 %v667
        %669 = vmatprep.subr.mxu0 0.0
        %v670 = vand.u32 %v178, 4294901760
        %v671 = vsub.f32 %v178, %v670
        %672 = vmatpush1.msra.mxu0 %v671
        %673 = vmatprep.subr.mxu0 0.0
        %v674 = vand.u32 %v179, 4294901760
        %v675 = vsub.f32 %v179, %v674
        %676 = vmatpush1.msra.mxu0 %v675
        %677 = vmatprep.subr.mxu0 0.0
        %v678 = vand.u32 %v180, 4294901760
        %v679 = vsub.f32 %v180, %v678
        %680 = vmatpush1.msra.mxu0 %v679
        %681 = vmatprep.subr.mxu0 0.0
        %v682 = vand.u32 %v181, 4294901760
        %v683 = vsub.f32 %v181, %v682
        %684 = vmatpush1.msra.mxu0 %v683
        %685 = vmatprep.subr.mxu0 0.0
        %v686 = vand.u32 %v182, 4294901760
        %v687 = vsub.f32 %v182, %v686
        %688 = vmatpush1.msra.mxu0 %v687
        %689 = vmatprep.subr.mxu0 0.0
        %v690 = vand.u32 %v183, 4294901760
        %v691 = vsub.f32 %v183, %v690
        %692 = vmatpush1.msra.mxu0 %v691
        %693 = vmatprep.subr.mxu0 0.0
        %v694 = vand.u32 %v184, 4294901760
        %v695 = vsub.f32 %v184, %v694
        %696 = vmatpush1.msra.mxu0 %v695
        %697 = vmatprep.subr.mxu0 0.0
        %v698 = vand.u32 %v185, 4294901760
        %v699 = vsub.f32 %v185, %v698
        %700 = vmatpush1.msra.mxu0 %v699
        %701 = vmatprep.subr.mxu0 0.0
        %v702 = vand.u32 %v186, 4294901760
        %v703 = vsub.f32 %v186, %v702
        %704 = vmatpush1.msra.mxu0 %v703
        %v705 = vand.u32 %v232, 4294901760
        %v706 = vsub.f32 %v232, %v705
        %707 = vmatprep.mubr.f32.mxu0 %v706
        %v708 = vand.u32 %v231, 4294901760
        %v709 = vsub.f32 %v231, %v708
        %710 = vmatmul.mubr.f32.gmra.mrb[0].mxu0 %v709
        %v711 = vpop.f32.mrb[0].mxu0
        %v712 = vadd.f32 %v574, %v711
        %v713 = vpop.f32.mrb[0].mxu0
        %714 = vdwg.mxu0
        %715 = vmatprep.subr.mxu0 0.0
        %v716 = vand.u32 %v155, 4294901760
        %717 = vmatpush1.msra.mxu0 %v716
        %718 = vmatprep.subr.mxu0 0.0
        %v719 = vand.u32 %v156, 4294901760
        %720 = vmatpush1.msra.mxu0 %v719
        %721 = vmatprep.subr.mxu0 0.0
        %v722 = vand.u32 %v157, 4294901760
        %723 = vmatpush1.msra.mxu0 %v722
        %724 = vmatprep.subr.mxu0 0.0
        %v725 = vand.u32 %v158, 4294901760
        %726 = vmatpush1.msra.mxu0 %v725
        %727 = vmatprep.subr.mxu0 0.0
        %v728 = vand.u32 %v159, 4294901760
        %729 = vmatpush1.msra.mxu0 %v728
        %730 = vmatprep.subr.mxu0 0.0
        %v731 = vand.u32 %v160, 4294901760
        %732 = vmatpush1.msra.mxu0 %v731
        %733 = vmatprep.subr.mxu0 0.0
        %v734 = vand.u32 %v161, 4294901760
        %735 = vmatpush1.msra.mxu0 %v734
        %736 = vmatprep.subr.mxu0 0.0
        %v737 = vand.u32 %v162, 4294901760
        %738 = vmatpush1.msra.mxu0 %v737
        %739 = vmatprep.subr.mxu0 0.0
        %v740 = vand.u32 %v163, 4294901760
        %741 = vmatpush1.msra.mxu0 %v740
        %742 = vmatprep.subr.mxu0 0.0
        %v743 = vand.u32 %v164, 4294901760
        %744 = vmatpush1.msra.mxu0 %v743
        %745 = vmatprep.subr.mxu0 0.0
        %v746 = vand.u32 %v165, 4294901760
        %747 = vmatpush1.msra.mxu0 %v746
        %748 = vmatprep.subr.mxu0 0.0
        %v749 = vand.u32 %v166, 4294901760
        %750 = vmatpush1.msra.mxu0 %v749
        %751 = vmatprep.subr.mxu0 0.0
        %v752 = vand.u32 %v167, 4294901760
        %753 = vmatpush1.msra.mxu0 %v752
        %754 = vmatprep.subr.mxu0 0.0
        %v755 = vand.u32 %v168, 4294901760
        %756 = vmatpush1.msra.mxu0 %v755
        %757 = vmatprep.subr.mxu0 0.0
        %v758 = vand.u32 %v169, 4294901760
        %759 = vmatpush1.msra.mxu0 %v758
        %760 = vmatprep.subr.mxu0 0.0
        %v761 = vand.u32 %v170, 4294901760
        %762 = vmatpush1.msra.mxu0 %v761
        %763 = vmatprep.subr.mxu0 0.0
        %v764 = vand.u32 %v171, 4294901760
        %765 = vmatpush1.msra.mxu0 %v764
        %766 = vmatprep.subr.mxu0 0.0
        %v767 = vand.u32 %v172, 4294901760
        %768 = vmatpush1.msra.mxu0 %v767
        %769 = vmatprep.subr.mxu0 0.0
        %v770 = vand.u32 %v173, 4294901760
        %771 = vmatpush1.msra.mxu0 %v770
        %772 = vmatprep.subr.mxu0 0.0
        %v773 = vand.u32 %v174, 4294901760
        %774 = vmatpush1.msra.mxu0 %v773
        %775 = vmatprep.subr.mxu0 0.0
        %v776 = vand.u32 %v175, 4294901760
        %777 = vmatpush1.msra.mxu0 %v776
        %778 = vmatprep.subr.mxu0 0.0
        %v779 = vand.u32 %v176, 4294901760
        %780 = vmatpush1.msra.mxu0 %v779
        %781 = vmatprep.subr.mxu0 0.0
        %v782 = vand.u32 %v177, 4294901760
        %783 = vmatpush1.msra.mxu0 %v782
        %784 = vmatprep.subr.mxu0 0.0
        %v785 = vand.u32 %v178, 4294901760
        %786 = vmatpush1.msra.mxu0 %v785
        %787 = vmatprep.subr.mxu0 0.0
        %v788 = vand.u32 %v179, 4294901760
        %789 = vmatpush1.msra.mxu0 %v788
        %790 = vmatprep.subr.mxu0 0.0
        %v791 = vand.u32 %v180, 4294901760
        %792 = vmatpush1.msra.mxu0 %v791
        %793 = vmatprep.subr.mxu0 0.0
        %v794 = vand.u32 %v181, 4294901760
        %795 = vmatpush1.msra.mxu0 %v794
        %796 = vmatprep.subr.mxu0 0.0
        %v797 = vand.u32 %v182, 4294901760
        %798 = vmatpush1.msra.mxu0 %v797
        %799 = vmatprep.subr.mxu0 0.0
        %v800 = vand.u32 %v183, 4294901760
        %801 = vmatpush1.msra.mxu0 %v800
        %802 = vmatprep.subr.mxu0 0.0
        %v803 = vand.u32 %v184, 4294901760
        %804 = vmatpush1.msra.mxu0 %v803
        %805 = vmatprep.subr.mxu0 0.0
        %v806 = vand.u32 %v185, 4294901760
        %807 = vmatpush1.msra.mxu0 %v806
        %808 = vmatprep.subr.mxu0 0.0
        %v809 = vand.u32 %v186, 4294901760
        %810 = vmatpush1.msra.mxu0 %v809
        %v811 = vand.u32 %v232, 4294901760
        %v812 = vsub.f32 %v232, %v811
        %v813 = vand.u32 %v812, 4294901760
        %814 = vmatprep.mubr.f32.mxu0 %v813
        %v815 = vand.u32 %v231, 4294901760
        %v816 = vsub.f32 %v231, %v815
        %v817 = vand.u32 %v816, 4294901760
        %818 = vmatmul.mubr.f32.gmra.mrb[0].mxu0 %v817
        %v819 = vpop.f32.mrb[0].mxu0
        %v820 = vadd.f32 %v712, %v819
        %v821 = vpop.f32.mrb[0].mxu0
        %822 = vdwg.mxu0
        %823 = vmatprep.subr.mxu0 0.0
        %v824 = vand.u32 %v155, 4294901760
        %v825 = vsub.f32 %v155, %v824
        %v826 = vand.u32 %v825, 4294901760
        %827 = vmatpush1.msra.mxu0 %v826
        %828 = vmatprep.subr.mxu0 0.0
        %v829 = vand.u32 %v156, 4294901760
        %v830 = vsub.f32 %v156, %v829
        %v831 = vand.u32 %v830, 4294901760
        %832 = vmatpush1.msra.mxu0 %v831
        %833 = vmatprep.subr.mxu0 0.0
        %v834 = vand.u32 %v157, 4294901760
        %v835 = vsub.f32 %v157, %v834
        %v836 = vand.u32 %v835, 4294901760
        %837 = vmatpush1.msra.mxu0 %v836
        %838 = vmatprep.subr.mxu0 0.0
        %v839 = vand.u32 %v158, 4294901760
        %v840 = vsub.f32 %v158, %v839
        %v841 = vand.u32 %v840, 4294901760
        %842 = vmatpush1.msra.mxu0 %v841
        %843 = vmatprep.subr.mxu0 0.0
        %v844 = vand.u32 %v159, 4294901760
        %v845 = vsub.f32 %v159, %v844
        %v846 = vand.u32 %v845, 4294901760
        %847 = vmatpush1.msra.mxu0 %v846
        %848 = vmatprep.subr.mxu0 0.0
        %v849 = vand.u32 %v160, 4294901760
        %v850 = vsub.f32 %v160, %v849
        %v851 = vand.u32 %v850, 4294901760
        %852 = vmatpush1.msra.mxu0 %v851
        %853 = vmatprep.subr.mxu0 0.0
        %v854 = vand.u32 %v161, 4294901760
        %v855 = vsub.f32 %v161, %v854
        %v856 = vand.u32 %v855, 4294901760
        %857 = vmatpush1.msra.mxu0 %v856
        %858 = vmatprep.subr.mxu0 0.0
        %v859 = vand.u32 %v162, 4294901760
        %v860 = vsub.f32 %v162, %v859
        %v861 = vand.u32 %v860, 4294901760
        %862 = vmatpush1.msra.mxu0 %v861
        %863 = vmatprep.subr.mxu0 0.0
        %v864 = vand.u32 %v163, 4294901760
        %v865 = vsub.f32 %v163, %v864
        %v866 = vand.u32 %v865, 4294901760
        %867 = vmatpush1.msra.mxu0 %v866
        %868 = vmatprep.subr.mxu0 0.0
        %v869 = vand.u32 %v164, 4294901760
        %v870 = vsub.f32 %v164, %v869
        %v871 = vand.u32 %v870, 4294901760
        %872 = vmatpush1.msra.mxu0 %v871
        %873 = vmatprep.subr.mxu0 0.0
        %v874 = vand.u32 %v165, 4294901760
        %v875 = vsub.f32 %v165, %v874
        %v876 = vand.u32 %v875, 4294901760
        %877 = vmatpush1.msra.mxu0 %v876
        %878 = vmatprep.subr.mxu0 0.0
        %v879 = vand.u32 %v166, 4294901760
        %v880 = vsub.f32 %v166, %v879
        %v881 = vand.u32 %v880, 4294901760
        %882 = vmatpush1.msra.mxu0 %v881
        %883 = vmatprep.subr.mxu0 0.0
        %v884 = vand.u32 %v167, 4294901760
        %v885 = vsub.f32 %v167, %v884
        %v886 = vand.u32 %v885, 4294901760
        %887 = vmatpush1.msra.mxu0 %v886
        %888 = vmatprep.subr.mxu0 0.0
        %v889 = vand.u32 %v168, 4294901760
        %v890 = vsub.f32 %v168, %v889
        %v891 = vand.u32 %v890, 4294901760
        %892 = vmatpush1.msra.mxu0 %v891
        %893 = vmatprep.subr.mxu0 0.0
        %v894 = vand.u32 %v169, 4294901760
        %v895 = vsub.f32 %v169, %v894
        %v896 = vand.u32 %v895, 4294901760
        %897 = vmatpush1.msra.mxu0 %v896
        %898 = vmatprep.subr.mxu0 0.0
        %v899 = vand.u32 %v170, 4294901760
        %v900 = vsub.f32 %v170, %v899
        %v901 = vand.u32 %v900, 4294901760
        %902 = vmatpush1.msra.mxu0 %v901
        %903 = vmatprep.subr.mxu0 0.0
        %v904 = vand.u32 %v171, 4294901760
        %v905 = vsub.f32 %v171, %v904
        %v906 = vand.u32 %v905, 4294901760
        %907 = vmatpush1.msra.mxu0 %v906
        %908 = vmatprep.subr.mxu0 0.0
        %v909 = vand.u32 %v172, 4294901760
        %v910 = vsub.f32 %v172, %v909
        %v911 = vand.u32 %v910, 4294901760
        %912 = vmatpush1.msra.mxu0 %v911
        %913 = vmatprep.subr.mxu0 0.0
        %v914 = vand.u32 %v173, 4294901760
        %v915 = vsub.f32 %v173, %v914
        %v916 = vand.u32 %v915, 4294901760
        %917 = vmatpush1.msra.mxu0 %v916
        %918 = vmatprep.subr.mxu0 0.0
        %v919 = vand.u32 %v174, 4294901760
        %v920 = vsub.f32 %v174, %v919
        %v921 = vand.u32 %v920, 4294901760
        %922 = vmatpush1.msra.mxu0 %v921
        %923 = vmatprep.subr.mxu0 0.0
        %v924 = vand.u32 %v175, 4294901760
        %v925 = vsub.f32 %v175, %v924
        %v926 = vand.u32 %v925, 4294901760
        %927 = vmatpush1.msra.mxu0 %v926
        %928 = vmatprep.subr.mxu0 0.0
        %v929 = vand.u32 %v176, 4294901760
        %v930 = vsub.f32 %v176, %v929
        %v931 = vand.u32 %v930, 4294901760
        %932 = vmatpush1.msra.mxu0 %v931
        %933 = vmatprep.subr.mxu0 0.0
        %v934 = vand.u32 %v177, 4294901760
        %v935 = vsub.f32 %v177, %v934
        %v936 = vand.u32 %v935, 4294901760
        %937 = vmatpush1.msra.mxu0 %v936
        %938 = vmatprep.subr.mxu0 0.0
        %v939 = vand.u32 %v178, 4294901760
        %v940 = vsub.f32 %v178, %v939
        %v941 = vand.u32 %v940, 4294901760
        %942 = vmatpush1.msra.mxu0 %v941
        %943 = vmatprep.subr.mxu0 0.0
        %v944 = vand.u32 %v179, 4294901760
        %v945 = vsub.f32 %v179, %v944
        %v946 = vand.u32 %v945, 4294901760
        %947 = vmatpush1.msra.mxu0 %v946
        %948 = vmatprep.subr.mxu0 0.0
        %v949 = vand.u32 %v180, 4294901760
        %v950 = vsub.f32 %v180, %v949
        %v951 = vand.u32 %v950, 4294901760
        %952 = vmatpush1.msra.mxu0 %v951
        %953 = vmatprep.subr.mxu0 0.0
        %v954 = vand.u32 %v181, 4294901760
        %v955 = vsub.f32 %v181, %v954
        %v956 = vand.u32 %v955, 4294901760
        %957 = vmatpush1.msra.mxu0 %v956
        %958 = vmatprep.subr.mxu0 0.0
        %v959 = vand.u32 %v182, 4294901760
        %v960 = vsub.f32 %v182, %v959
        %v961 = vand.u32 %v960, 4294901760
        %962 = vmatpush1.msra.mxu0 %v961
        %963 = vmatprep.subr.mxu0 0.0
        %v964 = vand.u32 %v183, 4294901760
        %v965 = vsub.f32 %v183, %v964
        %v966 = vand.u32 %v965, 4294901760
        %967 = vmatpush1.msra.mxu0 %v966
        %968 = vmatprep.subr.mxu0 0.0
        %v969 = vand.u32 %v184, 4294901760
        %v970 = vsub.f32 %v184, %v969
        %v971 = vand.u32 %v970, 4294901760
        %972 = vmatpush1.msra.mxu0 %v971
        %973 = vmatprep.subr.mxu0 0.0
        %v974 = vand.u32 %v185, 4294901760
        %v975 = vsub.f32 %v185, %v974
        %v976 = vand.u32 %v975, 4294901760
        %977 = vmatpush1.msra.mxu0 %v976
        %978 = vmatprep.subr.mxu0 0.0
        %v979 = vand.u32 %v186, 4294901760
        %v980 = vsub.f32 %v186, %v979
        %v981 = vand.u32 %v980, 4294901760
        %982 = vmatpush1.msra.mxu0 %v981
        %v983 = vand.u32 %v232, 4294901760
        %984 = vmatprep.mubr.f32.mxu0 %v983
        %v985 = vand.u32 %v231, 4294901760
        %986 = vmatmul.mubr.f32.gmra.mrb[0].mxu0 %v985
        %v987 = vpop.f32.mrb[0].mxu0
        %v988 = vadd.f32 %v820, %v987
        %v989 = vpop.f32.mrb[0].mxu0
        %990 = vdwg.mxu0
        %991 = vmatprep.subr.mxu0 0.0
        %v992 = vand.u32 %v155, 4294901760
        %993 = vmatpush1.msra.mxu0 %v992
        %994 = vmatprep.subr.mxu0 0.0
        %v995 = vand.u32 %v156, 4294901760
        %996 = vmatpush1.msra.mxu0 %v995
        %997 = vmatprep.subr.mxu0 0.0
        %v998 = vand.u32 %v157, 4294901760
        %999 = vmatpush1.msra.mxu0 %v998
        %1000 = vmatprep.subr.mxu0 0.0
        %v1001 = vand.u32 %v158, 4294901760
        %1002 = vmatpush1.msra.mxu0 %v1001
        %1003 = vmatprep.subr.mxu0 0.0
        %v1004 = vand.u32 %v159, 4294901760
        %1005 = vmatpush1.msra.mxu0 %v1004
        %1006 = vmatprep.subr.mxu0 0.0
        %v1007 = vand.u32 %v160, 4294901760
        %1008 = vmatpush1.msra.mxu0 %v1007
        %1009 = vmatprep.subr.mxu0 0.0
        %v1010 = vand.u32 %v161, 4294901760
        %1011 = vmatpush1.msra.mxu0 %v1010
        %1012 = vmatprep.subr.mxu0 0.0
        %v1013 = vand.u32 %v162, 4294901760
        %1014 = vmatpush1.msra.mxu0 %v1013
        %1015 = vmatprep.subr.mxu0 0.0
        %v1016 = vand.u32 %v163, 4294901760
        %1017 = vmatpush1.msra.mxu0 %v1016
        %1018 = vmatprep.subr.mxu0 0.0
        %v1019 = vand.u32 %v164, 4294901760
        %1020 = vmatpush1.msra.mxu0 %v1019
        %1021 = vmatprep.subr.mxu0 0.0
        %v1022 = vand.u32 %v165, 4294901760
        %1023 = vmatpush1.msra.mxu0 %v1022
        %1024 = vmatprep.subr.mxu0 0.0
        %v1025 = vand.u32 %v166, 4294901760
        %1026 = vmatpush1.msra.mxu0 %v1025
        %1027 = vmatprep.subr.mxu0 0.0
        %v1028 = vand.u32 %v167, 4294901760
        %1029 = vmatpush1.msra.mxu0 %v1028
        %1030 = vmatprep.subr.mxu0 0.0
        %v1031 = vand.u32 %v168, 4294901760
        %1032 = vmatpush1.msra.mxu0 %v1031
        %1033 = vmatprep.subr.mxu0 0.0
        %v1034 = vand.u32 %v169, 4294901760
        %1035 = vmatpush1.msra.mxu0 %v1034
        %1036 = vmatprep.subr.mxu0 0.0
        %v1037 = vand.u32 %v170, 4294901760
        %1038 = vmatpush1.msra.mxu0 %v1037
        %1039 = vmatprep.subr.mxu0 0.0
        %v1040 = vand.u32 %v171, 4294901760
        %1041 = vmatpush1.msra.mxu0 %v1040
        %1042 = vmatprep.subr.mxu0 0.0
        %v1043 = vand.u32 %v172, 4294901760
        %1044 = vmatpush1.msra.mxu0 %v1043
        %1045 = vmatprep.subr.mxu0 0.0
        %v1046 = vand.u32 %v173, 4294901760
        %1047 = vmatpush1.msra.mxu0 %v1046
        %1048 = vmatprep.subr.mxu0 0.0
        %v1049 = vand.u32 %v174, 4294901760
        %1050 = vmatpush1.msra.mxu0 %v1049
        %1051 = vmatprep.subr.mxu0 0.0
        %v1052 = vand.u32 %v175, 4294901760
        %1053 = vmatpush1.msra.mxu0 %v1052
        %1054 = vmatprep.subr.mxu0 0.0
        %v1055 = vand.u32 %v176, 4294901760
        %1056 = vmatpush1.msra.mxu0 %v1055
        %1057 = vmatprep.subr.mxu0 0.0
        %v1058 = vand.u32 %v177, 4294901760
        %1059 = vmatpush1.msra.mxu0 %v1058
        %1060 = vmatprep.subr.mxu0 0.0
        %v1061 = vand.u32 %v178, 4294901760
        %1062 = vmatpush1.msra.mxu0 %v1061
        %1063 = vmatprep.subr.mxu0 0.0
        %v1064 = vand.u32 %v179, 4294901760
        %1065 = vmatpush1.msra.mxu0 %v1064
        %1066 = vmatprep.subr.mxu0 0.0
        %v1067 = vand.u32 %v180, 4294901760
        %1068 = vmatpush1.msra.mxu0 %v1067
        %1069 = vmatprep.subr.mxu0 0.0
        %v1070 = vand.u32 %v181, 4294901760
        %1071 = vmatpush1.msra.mxu0 %v1070
        %1072 = vmatprep.subr.mxu0 0.0
        %v1073 = vand.u32 %v182, 4294901760
        %1074 = vmatpush1.msra.mxu0 %v1073
        %1075 = vmatprep.subr.mxu0 0.0
        %v1076 = vand.u32 %v183, 4294901760
        %1077 = vmatpush1.msra.mxu0 %v1076
        %1078 = vmatprep.subr.mxu0 0.0
        %v1079 = vand.u32 %v184, 4294901760
        %1080 = vmatpush1.msra.mxu0 %v1079
        %1081 = vmatprep.subr.mxu0 0.0
        %v1082 = vand.u32 %v185, 4294901760
        %1083 = vmatpush1.msra.mxu0 %v1082
        %1084 = vmatprep.subr.mxu0 0.0
        %v1085 = vand.u32 %v186, 4294901760
        %1086 = vmatpush1.msra.mxu0 %v1085
        %v1087 = vand.u32 %v232, 4294901760
        %1088 = vmatprep.mubr.f32.mxu0 %v1087
        %v1089 = vand.u32 %v231, 4294901760
        %1090 = vmatmul.mubr.f32.gmra.mrb[0].mxu0 %v1089
        %v1091 = vpop.f32.mrb[0].mxu0
        %v1092 = vadd.f32 %v988, %v1091
        %v1093 = vpop.f32.mrb[0].mxu0
        %1094 = vdwg.mxu0
        %1095 = vst [vmem:[%s149] sm:$0xff] %v1092
        %s1096 = sand.u32 %s72, 1
        %s1097 = scalar_lea.sflag [#allocation4], %s1096
        %s1098 = sand.u32 %s72, 1
        %s1099 = smul.addr %s1098, 8
        %s1100 = scalar_lea.vmem [#allocation5], %s1099
        // Predicated region
        $region33: #{tpu_custom_call.1} parent=27 // pred_check
          %p1101 = pneg %p82
        $region34: #{tpu_custom_call.1} parent=27 // pred_check_branch
          %1103 = sbr.rel (%p1101) target = $region36
        $region35: #{tpu_custom_call.1} parent=27 // pred_region
          %s1105 = ssub.s32 128, 128
          %1106 = vsyncadd %s1097, %s1105
          %s1107 = smul.addr %s17, 128
          %s1108 = scalar_lea.hbm %s2, %s1107
          %s1110 = sshll.u32 %s1100, 4
          %s1111 = int_to_ptr.vmem [resolvable:$true] %s1110
          %1113 = dma.vmem_to_hbm [thread:$0]  %s1111, 128, %s1108, %s1097
        $region36: #{tpu_custom_call.1} parent=27 // pred_fallthru
          _
      $region28: #{tpu_custom_call.1} parent=5 // pred_fallthru
        _
      %p1114 = scmp.le.s32.totalorder 2, %s12
      // Predicated region
      $region37: #{tpu_custom_call.1} parent=5 // pred_check
        %p1115 = pneg %p1114
      $region38: #{tpu_custom_call.1} parent=5 // pred_check_branch
        %1117 = sbr.rel (%p1115) target = $region40
      $region39: #{tpu_custom_call.1} parent=5 // pred_region
        %s1118 = ssub.s32 %s12, 2
        // Predicated region
        $region41: #{tpu_custom_call.1} parent=39 // pred_check
          %p1119 = pneg %p88
        $region42: #{tpu_custom_call.1} parent=39 // pred_check_branch
          %1121 = sbr.rel (%p1119) target = $region44
        $region43: #{tpu_custom_call.1} parent=39 // pred_region
          %s1122 = sand.u32 %s73, 1
          %s1123 = scalar_lea.sflag [#allocation4], %s1122
          %s1124 = sand.u32 %s73, 1
          %s1125 = smul.addr %s1124, 8
          %s1126 = scalar_lea.vmem [#allocation5], %s1125
          %1127 = dma.done %s1123, 128
        $region44: #{tpu_custom_call.1} parent=39 // pred_fallthru
          _
      $region40: #{tpu_custom_call.1} parent=5 // pred_fallthru
        _
    $region6: #{tpu_custom_call.1} parent=1 // loop_footer
      %s16 = sadd.s32 1, %s12
    $region7: #{tpu_custom_call.1} parent=1 // loop_footer_branch
      %11 = sbr.rel target = $region3
    $region8: #{tpu_custom_call.1} parent=1 // loop_exit
      _
    %1128 = vsyncpa [#allocation3], 1
    %s1129 = scalar_lea.sflag [#allocation3], 1
    %1130 = vsyncpa %s1129, 1
    %1131 = vsyncpa [#allocation4], 1
    %s1132 = scalar_lea.sflag [#allocation4], 1
    %1133 = vsyncpa %s1132, 1

</llo_original>
